<compile_context>
chip_gen: v5e
topology: v5e:2x2
jax: 0.10.0
libtpu: 0.0.40
codegen_flags: <defaults>
</compile_context>

<pallas_src>
import functools
import math

import jax
import jax.numpy as jnp
from jax.experimental import pallas as pl
from jax.experimental.pallas import tpu as pltpu


# -----------------------------------------------------------------------------
# Fused kernel: full GAT forward for one batch element.
# -----------------------------------------------------------------------------
def gat_fused_kernel(adj_ref, e1_ref, h1_ref, w2_ref, a2_ref, mask_ref,
                     clfw_ref, clfb_ref, out_ref, *, alpha, nheads):
    adj = adj_ref[0]                       # (N, N) f32
    neg = jnp.float32(-9e15)

    # ---------------- layer 1: all heads fused, concat folded into layer 2 ---
    # e1_ref[k] already holds leakyrelu(f1_k[i] + f2_k[j]) (batch-invariant,
    # hoisted to the wrapper).  h1_ref[k] = X @ W_k  (bf16, batch-invariant).
    h2 = None                              # accumulates x_cat @ W_out in f32
    for k in range(nheads):                # nheads is tiny -> unrolled
        att = jnp.where(adj > 0.0, e1_ref[k], neg)
        # softmax over torch dim=1 of (bs, N, N)  ==  axis 0 of this slice
        m = jnp.max(att, axis=0, keepdims=True)
        p = jnp.exp(att - m)
        att = p / jnp.sum(p, axis=0, keepdims=True)
        hp = jnp.dot(att.astype(jnp.bfloat16), h1_ref[k],
                     preferred_element_type=jnp.float32)       # (N, nhid)
        hp = jnp.where(hp > 0.0, hp, jnp.exp(hp) - 1.0)        # F.elu (concat)
        # x_cat @ W_out  ==  sum_k  hp_k @ W_out[k*nhid:(k+1)*nhid, :]
        part = jnp.dot(hp.astype(jnp.bfloat16), w2_ref[k],
                       preferred_element_type=jnp.float32)     # (N, nclass)
        h2 = part if h2 is None else h2 + part

    # ---------------- layer 2 (out_att, concat=False) ------------------------
    # Both attention projections in one (N, F) @ (F, 2) dot.
    f12 = jnp.dot(h2.astype(jnp.bfloat16), a2_ref[...],
                  preferred_element_type=jnp.float32)          # (N, 2)
    # e2[i, j] = f1[i] + f2[j]; the (N,1)->(1,N) flip is one tiny XLU move.
    e2 = f12[:, 0:1] + jnp.transpose(f12[:, 1:2])              # (N, N)
    e2 = jnp.where(e2 > 0.0, e2, alpha * e2)                   # LeakyReLU

    att2 = jnp.where(adj > 0.0, e2, neg)
    m2 = jnp.max(att2, axis=0, keepdims=True)                  # torch dim=1
    p2 = jnp.exp(att2 - m2)
    att2 = p2 / jnp.sum(p2, axis=0, keepdims=True)

    hp2 = jnp.dot(att2.astype(jnp.bfloat16), h2.astype(jnp.bfloat16),
                  preferred_element_type=jnp.float32)          # (N, nclass)
    x2 = jnp.where(hp2 > 0.0, hp2, jnp.exp(hp2) - 1.0)         # outer F.elu

    # ---------------- mask pooling + classifier epilogue ---------------------
    sym = jnp.dot(mask_ref[0], x2,
                  preferred_element_type=jnp.float32)          # (1, nclass)
    logits = jnp.dot(sym, clfw_ref[...],
                     preferred_element_type=jnp.float32) + clfb_ref[...]
    # Per-step output is a single (1, dis_num) row -> the masked partial store
    # is negligible; all (bs, N, F) activation writebacks were removed by the
    # fusion.
    out_ref[0] = logits


# -----------------------------------------------------------------------------
# Wrapper: hoist batch-invariant layer-1 work, reshape params, one pallas_call.
# -----------------------------------------------------------------------------
@functools.partial(jax.jit, static_argnames=("alpha",))
def gat_forward(params, label, adj, mask, *, alpha):
    bs, N, _ = adj.shape
    nheads = len(params["heads"])
    nhid = params["heads"][0][0].shape[1]
    nclass = params["W_out"].shape[1]
    embed = params["embed"]                      # (N, Fin); dropout = identity

    # ---- batch-invariant layer-1 precompute (hoisted out of the kernel) -----
    e1_list, h1_list = [], []
    for (Wk, ak) in params["heads"]:
        hk = embed @ Wk                          # (N, nhid), done ONCE not bs×
        f1 = hk @ ak[:nhid, 0]                   # (N,)
        f2 = hk @ ak[nhid:, 0]                   # (N,)
        ek = f1[:, None] + f2[None, :]           # e1[i,j] = f1[i] + f2[j]
        ek = jnp.where(ek > 0, ek, alpha * ek)   # LeakyReLU (batch-invariant)
        e1_list.append(ek)
        h1_list.append(hk)
    e1 = jnp.stack(e1_list).astype(jnp.float32)      # (nheads, N, N)
    h1 = jnp.stack(h1_list).astype(jnp.bfloat16)     # (nheads, N, nhid)

    # layer-2 / classifier params, reshaped once in the wrapper
    w2 = params["W_out"].reshape(nheads, nhid, nclass).astype(jnp.bfloat16)
    a2 = jnp.concatenate([params["a_out"][:nclass], params["a_out"][nclass:]],
                         axis=1).astype(jnp.bfloat16)          # (nclass, 2)
    clf_wt = params["clf_W"].T.astype(jnp.float32)             # (nclass, dis)
    clf_b = params["clf_b"].reshape(1, -1).astype(jnp.float32)  # (1, dis)
    dis_num = clf_b.shape[1]

    # Guard the single-block (N, N) softmax: per-step VMEM ~ (nheads+4)*N^2*4B.
    # Keeps a future N bump from silently blowing past v7x's 64 MiB VMEM
    # (32 MiB default scoped limit).
    assert (nheads + 4) * N * N * 4 < 16 * 1024 * 1024, (
        "N too large for single-block attention; retile flash-style over node "
        "blocks with running max/sum scratch.")
    # TODO(synk): flash-style tiled softmax over node blocks for large N.

    kernel = functools.partial(gat_fused_kernel, alpha=alpha, nheads=nheads)
    logits3 = pl.pallas_call(
        kernel,
        out_shape=jax.ShapeDtypeStruct((bs, 1, dis_num), jnp.float32),
        grid=(bs,),
        in_specs=[
            pl.BlockSpec((1, N, N), lambda b: (b, 0, 0)),             # adj
            pl.BlockSpec((nheads, N, N), lambda b: (0, 0, 0)),        # e1
            pl.BlockSpec((nheads, N, nhid), lambda b: (0, 0, 0)),     # h1
            pl.BlockSpec((nheads, nhid, nclass), lambda b: (0, 0, 0)),  # W_out
            pl.BlockSpec((nclass, 2), lambda b: (0, 0)),              # a_out
            pl.BlockSpec((1, 1, N), lambda b: (b, 0, 0)),             # mask
            pl.BlockSpec((nclass, dis_num), lambda b: (0, 0)),        # clf W^T
            pl.BlockSpec((1, dis_num), lambda b: (0, 0)),             # clf b
        ],
        out_specs=pl.BlockSpec((1, 1, dis_num), lambda b: (b, 0, 0)),
        # Full fusion means heads can't also be a parallel grid axis (layer 2
        # consumes every head); bs >= 2 grid points keep both v7x TCs busy.
        compiler_params=pltpu.CompilerParams(
            dimension_semantics=("parallel",)),
    )(adj, e1, h1, w2, a2, mask, clf_wt, clf_b)
    logits = logits3[:, 0, :]                                   # (bs, dis_num)

    # ---- cross-entropy + accuracy (tiny glue) --------------------------------
    logz = jax.nn.logsumexp(logits, axis=1)
    picked = jnp.take_along_axis(logits, label[:, None], axis=1)[:, 0]
    loss = jnp.mean(logz - picked)
    pred = jnp.argmax(logits, axis=1)
    num_correct = jnp.sum((pred == label).astype(jnp.int32))
    return num_correct, loss


# -----------------------------------------------------------------------------
# Deterministic parameter init (mirrors shapes from GAT.__init__)
# -----------------------------------------------------------------------------
def xavier_uniform(key, shape, gain):
    fan_in, fan_out = shape[0], shape[1]
    limit = gain * math.sqrt(6.0 / (fan_in + fan_out))
    return jax.random.uniform(key, shape, jnp.float32, -limit, limit)


def init_params(key, *, nfeat, nhid, nclass, nheads, kg_node, embed_size,
                dis_num):
    keys = jax.random.split(key, 2 * nheads + 5)
    params = {}
    params["embed"] = jax.random.normal(keys[0], (kg_node, embed_size),
                                        jnp.float32)
    heads = []
    for h in range(nheads):
        Wk = xavier_uniform(keys[1 + 2 * h], (nfeat, nhid), 1.414)
        ak = xavier_uniform(keys[2 + 2 * h], (2 * nhid, 1), 1.414)
        heads.append((Wk, ak))
    params["heads"] = heads
    params["W_out"] = xavier_uniform(keys[2 * nheads + 1],
                                     (nhid * nheads, nclass), 1.414)
    params["a_out"] = xavier_uniform(keys[2 * nheads + 2],
                                     (2 * nclass, 1), 1.414)
    bound = 1.0 / math.sqrt(embed_size)
    params["clf_W"] = jax.random.uniform(keys[2 * nheads + 3],
                                         (dis_num, embed_size), jnp.float32,
                                         -bound, bound)
    params["clf_b"] = jax.random.uniform(keys[2 * nheads + 4],
                                         (dis_num,), jnp.float32,
                                         -bound, bound)
    return params


# -----------------------------------------------------------------------------
if __name__ == "__main__":
    # small shapes consistent with the module:
    #   nfeat == embed_size (embedding feeds the attention heads)
    #   nclass == embed_size (out_att output feeds Linear(embed_size, dis_num))
    bs = 2
    kg_node = 16
    embed_size = 32
    nfeat = embed_size
    nhid = 16
    nclass = embed_size
    nheads = 2
    dis_num = 5
    alpha = 0.2

    key = jax.random.PRNGKey(0)
    kp, ka, km, kl = jax.random.split(key, 4)

    params = init_params(kp, nfeat=nfeat, nhid=nhid, nclass=nclass,
                         nheads=nheads, kg_node=kg_node,
                         embed_size=embed_size, dis_num=dis_num)

    # binary adjacency with self-loops, float32
    adj = (jax.random.uniform(ka, (bs, kg_node, kg_node)) > 0.5
           ).astype(jnp.float32)
    adj = jnp.maximum(adj, jnp.eye(kg_node, dtype=jnp.float32)[None])

    # pooling mask over nodes: (bs, 1, N)
    mask = jax.random.uniform(km, (bs, 1, kg_node), jnp.float32)

    label = jax.random.randint(kl, (bs,), 0, dis_num, jnp.int32)

    num_correct, loss = gat_forward(params, label, adj, mask, alpha=alpha)
    jax.block_until_ready((num_correct, loss))
    assert jnp.isfinite(loss)
    print("KERNEL_OK")
</pallas_src>

<mosaic_0001>
module attributes {stable_mosaic.version = 11 : i64} {
  func.func @gat_fused_kernel(%arg0: i32, %arg1: memref<1x16x16xf32, #tpu.memory_space<vmem>>, %arg2: memref<2x16x16xf32, #tpu.memory_space<vmem>>, %arg3: memref<2x16x16xbf16, #tpu.memory_space<vmem>>, %arg4: memref<2x16x32xbf16, #tpu.memory_space<vmem>>, %arg5: memref<32x2xbf16, #tpu.memory_space<vmem>>, %arg6: memref<1x1x16xf32, #tpu.memory_space<vmem>>, %arg7: memref<32x5xf32, #tpu.memory_space<vmem>>, %arg8: memref<1x5xf32, #tpu.memory_space<vmem>>, %arg9: memref<1x1x5xf32, #tpu.memory_space<vmem>>) attributes {dimension_semantics = [#tpu.dimension_semantics<parallel>], iteration_bounds = array<i64: 2>, scalar_prefetch = 0 : i64, scratch_operands = 0 : i64, tpu.core_type = #tpu.core_type<tc>, window_params = [{transform_indices = @transform_0, window_bounds = array<i64: 1, 16, 16>}, {pipeline_mode = #tpu.pipeline_mode<synchronous>, transform_indices = @transform_1, window_bounds = array<i64: 2, 16, 16>}, {pipeline_mode = #tpu.pipeline_mode<synchronous>, transform_indices = @transform_2, window_bounds = array<i64: 2, 16, 16>}, {pipeline_mode = #tpu.pipeline_mode<synchronous>, transform_indices = @transform_3, window_bounds = array<i64: 2, 16, 32>}, {pipeline_mode = #tpu.pipeline_mode<synchronous>, transform_indices = @transform_4, window_bounds = array<i64: 32, 2>}, {transform_indices = @transform_5, window_bounds = array<i64: 1, 1, 16>}, {pipeline_mode = #tpu.pipeline_mode<synchronous>, transform_indices = @transform_6, window_bounds = array<i64: 32, 5>}, {pipeline_mode = #tpu.pipeline_mode<synchronous>, transform_indices = @transform_7, window_bounds = array<i64: 1, 5>}, {transform_indices = @transform_8, window_bounds = array<i64: 1, 1, 5>}]} {
    %c0 = arith.constant 0 : index
    %c0_0 = arith.constant 0 : index
    %c0_1 = arith.constant 0 : index
    %0 = vector.load %arg1[%c0, %c0_0, %c0_1] : memref<1x16x16xf32, #tpu.memory_space<vmem>>, vector<1x16x16xf32>
    %1 = vector.shape_cast %0 : vector<1x16x16xf32> to vector<16x16xf32>
    %cst = arith.constant 0.000000e+00 : f32
    %2 = vector.broadcast %cst : f32 to vector<16x16xf32>
    %3 = arith.cmpf ogt, %1, %2 : vector<16x16xf32>
    %c0_2 = arith.constant 0 : index
    %c0_3 = arith.constant 0 : index
    %c0_4 = arith.constant 0 : index
    %4 = vector.load %arg2[%c0_2, %c0_3, %c0_4] : memref<2x16x16xf32, #tpu.memory_space<vmem>>, vector<1x16x16xf32>
    %5 = vector.shape_cast %4 : vector<1x16x16xf32> to vector<16x16xf32>
    %cst_5 = arith.constant -9.000000e+15 : f32
    %6 = vector.broadcast %cst_5 : f32 to vector<16x16xf32>
    %7 = arith.select %3, %5, %6 : vector<16x16xi1>, vector<16x16xf32>
    %cst_6 = arith.constant dense<0xFF800000> : vector<16xf32>
    %8 = vector.multi_reduction <maximumf>, %7, %cst_6 [0] : vector<16x16xf32> to vector<16xf32>
    %9 = vector.shape_cast %8 : vector<16xf32> to vector<1x16xf32>
    %10 = vector.broadcast %9 : vector<1x16xf32> to vector<16x16xf32>
    %11 = arith.subf %7, %10 : vector<16x16xf32>
    %12 = math.exp %11 : vector<16x16xf32>
    %cst_7 = arith.constant dense<0.000000e+00> : vector<16xf32>
    %13 = vector.multi_reduction <add>, %12, %cst_7 [0] : vector<16x16xf32> to vector<16xf32>
    %14 = vector.shape_cast %13 : vector<16xf32> to vector<1x16xf32>
    %15 = vector.broadcast %14 : vector<1x16xf32> to vector<16x16xf32>
    %16 = arith.divf %12, %15 : vector<16x16xf32>
    %17 = arith.truncf %16 : vector<16x16xf32> to vector<16x16xbf16>
    %c0_8 = arith.constant 0 : index
    %c0_9 = arith.constant 0 : index
    %c0_10 = arith.constant 0 : index
    %18 = vector.load %arg3[%c0_8, %c0_9, %c0_10] : memref<2x16x16xbf16, #tpu.memory_space<vmem>>, vector<1x16x16xbf16>
    %19 = vector.shape_cast %18 : vector<1x16x16xbf16> to vector<16x16xbf16>
    %cst_11 = arith.constant dense<0.000000e+00> : vector<16x16xf32>
    %20 = tpu.matmul %17, %19, %cst_11 {dimension_numbers = #tpu.dot_dimension_numbers<[1], [0], [0], [1], [0, 0, 1, 1], [], []>} : vector<16x16xbf16>, vector<16x16xbf16>, vector<16x16xf32> -> vector<16x16xf32>
    %cst_12 = arith.constant 0.000000e+00 : f32
    %21 = vector.broadcast %cst_12 : f32 to vector<16x16xf32>
    %22 = arith.cmpf ogt, %20, %21 : vector<16x16xf32>
    %23 = math.exp %20 : vector<16x16xf32>
    %cst_13 = arith.constant 1.000000e+00 : f32
    %24 = vector.broadcast %cst_13 : f32 to vector<16x16xf32>
    %25 = arith.subf %23, %24 : vector<16x16xf32>
    %26 = arith.select %22, %20, %25 : vector<16x16xi1>, vector<16x16xf32>
    %27 = arith.truncf %26 : vector<16x16xf32> to vector<16x16xbf16>
    %c0_14 = arith.constant 0 : index
    %c0_15 = arith.constant 0 : index
    %c0_16 = arith.constant 0 : index
    %28 = vector.load %arg4[%c0_14, %c0_15, %c0_16] : memref<2x16x32xbf16, #tpu.memory_space<vmem>>, vector<1x16x32xbf16>
    %29 = vector.shape_cast %28 : vector<1x16x32xbf16> to vector<16x32xbf16>
    %cst_17 = arith.constant dense<0.000000e+00> : vector<16x32xf32>
    %30 = tpu.matmul %27, %29, %cst_17 {dimension_numbers = #tpu.dot_dimension_numbers<[1], [0], [0], [1], [0, 0, 1, 1], [], []>} : vector<16x16xbf16>, vector<16x32xbf16>, vector<16x32xf32> -> vector<16x32xf32>
    %cst_18 = arith.constant 0.000000e+00 : f32
    %31 = vector.broadcast %cst_18 : f32 to vector<16x16xf32>
    %32 = arith.cmpf ogt, %1, %31 : vector<16x16xf32>
    %c1 = arith.constant 1 : index
    %c0_19 = arith.constant 0 : index
    %c0_20 = arith.constant 0 : index
    %33 = vector.load %arg2[%c1, %c0_19, %c0_20] : memref<2x16x16xf32, #tpu.memory_space<vmem>>, vector<1x16x16xf32>
    %34 = vector.shape_cast %33 : vector<1x16x16xf32> to vector<16x16xf32>
    %cst_21 = arith.constant -9.000000e+15 : f32
    %35 = vector.broadcast %cst_21 : f32 to vector<16x16xf32>
    %36 = arith.select %32, %34, %35 : vector<16x16xi1>, vector<16x16xf32>
    %cst_22 = arith.constant dense<0xFF800000> : vector<16xf32>
    %37 = vector.multi_reduction <maximumf>, %36, %cst_22 [0] : vector<16x16xf32> to vector<16xf32>
    %38 = vector.shape_cast %37 : vector<16xf32> to vector<1x16xf32>
    %39 = vector.broadcast %38 : vector<1x16xf32> to vector<16x16xf32>
    %40 = arith.subf %36, %39 : vector<16x16xf32>
    %41 = math.exp %40 : vector<16x16xf32>
    %cst_23 = arith.constant dense<0.000000e+00> : vector<16xf32>
    %42 = vector.multi_reduction <add>, %41, %cst_23 [0] : vector<16x16xf32> to vector<16xf32>
    %43 = vector.shape_cast %42 : vector<16xf32> to vector<1x16xf32>
    %44 = vector.broadcast %43 : vector<1x16xf32> to vector<16x16xf32>
    %45 = arith.divf %41, %44 : vector<16x16xf32>
    %46 = arith.truncf %45 : vector<16x16xf32> to vector<16x16xbf16>
    %c1_24 = arith.constant 1 : index
    %c0_25 = arith.constant 0 : index
    %c0_26 = arith.constant 0 : index
    %47 = vector.load %arg3[%c1_24, %c0_25, %c0_26] : memref<2x16x16xbf16, #tpu.memory_space<vmem>>, vector<1x16x16xbf16>
    %48 = vector.shape_cast %47 : vector<1x16x16xbf16> to vector<16x16xbf16>
    %cst_27 = arith.constant dense<0.000000e+00> : vector<16x16xf32>
    %49 = tpu.matmul %46, %48, %cst_27 {dimension_numbers = #tpu.dot_dimension_numbers<[1], [0], [0], [1], [0, 0, 1, 1], [], []>} : vector<16x16xbf16>, vector<16x16xbf16>, vector<16x16xf32> -> vector<16x16xf32>
    %cst_28 = arith.constant 0.000000e+00 : f32
    %50 = vector.broadcast %cst_28 : f32 to vector<16x16xf32>
    %51 = arith.cmpf ogt, %49, %50 : vector<16x16xf32>
    %52 = math.exp %49 : vector<16x16xf32>
    %cst_29 = arith.constant 1.000000e+00 : f32
    %53 = vector.broadcast %cst_29 : f32 to vector<16x16xf32>
    %54 = arith.subf %52, %53 : vector<16x16xf32>
    %55 = arith.select %51, %49, %54 : vector<16x16xi1>, vector<16x16xf32>
    %56 = arith.truncf %55 : vector<16x16xf32> to vector<16x16xbf16>
    %c1_30 = arith.constant 1 : index
    %c0_31 = arith.constant 0 : index
    %c0_32 = arith.constant 0 : index
    %57 = vector.load %arg4[%c1_30, %c0_31, %c0_32] : memref<2x16x32xbf16, #tpu.memory_space<vmem>>, vector<1x16x32xbf16>
    %58 = vector.shape_cast %57 : vector<1x16x32xbf16> to vector<16x32xbf16>
    %cst_33 = arith.constant dense<0.000000e+00> : vector<16x32xf32>
    %59 = tpu.matmul %56, %58, %cst_33 {dimension_numbers = #tpu.dot_dimension_numbers<[1], [0], [0], [1], [0, 0, 1, 1], [], []>} : vector<16x16xbf16>, vector<16x32xbf16>, vector<16x32xf32> -> vector<16x32xf32>
    %60 = arith.addf %30, %59 : vector<16x32xf32>
    %61 = arith.truncf %60 : vector<16x32xf32> to vector<16x32xbf16>
    %c0_34 = arith.constant 0 : index
    %c0_35 = arith.constant 0 : index
    %62 = vector.load %arg5[%c0_34, %c0_35] : memref<32x2xbf16, #tpu.memory_space<vmem>>, vector<32x2xbf16>
    %cst_36 = arith.constant dense<0.000000e+00> : vector<16x2xf32>
    %63 = tpu.matmul %61, %62, %cst_36 {dimension_numbers = #tpu.dot_dimension_numbers<[1], [0], [0], [1], [0, 0, 1, 1], [], []>} : vector<16x32xbf16>, vector<32x2xbf16>, vector<16x2xf32> -> vector<16x2xf32>
    %64 = vector.extract_strided_slice %63 {offsets = [0, 0], sizes = [16, 1], strides = [1, 1]} : vector<16x2xf32> to vector<16x1xf32>
    %65 = vector.extract_strided_slice %63 {offsets = [0, 1], sizes = [16, 1], strides = [1, 1]} : vector<16x2xf32> to vector<16x1xf32>
    %66 = tpu.transpose %65, [1, 0] : vector<16x1xf32> -> vector<1x16xf32>
    %67 = vector.broadcast %64 : vector<16x1xf32> to vector<16x16xf32>
    %68 = vector.broadcast %66 : vector<1x16xf32> to vector<16x16xf32>
    %69 = arith.addf %67, %68 : vector<16x16xf32>
    %cst_37 = arith.constant 0.000000e+00 : f32
    %70 = vector.broadcast %cst_37 : f32 to vector<16x16xf32>
    %71 = arith.cmpf ogt, %69, %70 : vector<16x16xf32>
    %cst_38 = arith.constant 2.000000e-01 : f32
    %72 = vector.broadcast %cst_38 : f32 to vector<16x16xf32>
    %73 = arith.mulf %72, %69 : vector<16x16xf32>
    %74 = arith.select %71, %69, %73 : vector<16x16xi1>, vector<16x16xf32>
    %cst_39 = arith.constant 0.000000e+00 : f32
    %75 = vector.broadcast %cst_39 : f32 to vector<16x16xf32>
    %76 = arith.cmpf ogt, %1, %75 : vector<16x16xf32>
    %cst_40 = arith.constant -9.000000e+15 : f32
    %77 = vector.broadcast %cst_40 : f32 to vector<16x16xf32>
    %78 = arith.select %76, %74, %77 : vector<16x16xi1>, vector<16x16xf32>
    %cst_41 = arith.constant dense<0xFF800000> : vector<16xf32>
    %79 = vector.multi_reduction <maximumf>, %78, %cst_41 [0] : vector<16x16xf32> to vector<16xf32>
    %80 = vector.shape_cast %79 : vector<16xf32> to vector<1x16xf32>
    %81 = vector.broadcast %80 : vector<1x16xf32> to vector<16x16xf32>
    %82 = arith.subf %78, %81 : vector<16x16xf32>
    %83 = math.exp %82 : vector<16x16xf32>
    %cst_42 = arith.constant dense<0.000000e+00> : vector<16xf32>
    %84 = vector.multi_reduction <add>, %83, %cst_42 [0] : vector<16x16xf32> to vector<16xf32>
    %85 = vector.shape_cast %84 : vector<16xf32> to vector<1x16xf32>
    %86 = vector.broadcast %85 : vector<1x16xf32> to vector<16x16xf32>
    %87 = arith.divf %83, %86 : vector<16x16xf32>
    %88 = arith.truncf %87 : vector<16x16xf32> to vector<16x16xbf16>
    %89 = arith.truncf %60 : vector<16x32xf32> to vector<16x32xbf16>
    %cst_43 = arith.constant dense<0.000000e+00> : vector<16x32xf32>
    %90 = tpu.matmul %88, %89, %cst_43 {dimension_numbers = #tpu.dot_dimension_numbers<[1], [0], [0], [1], [0, 0, 1, 1], [], []>} : vector<16x16xbf16>, vector<16x32xbf16>, vector<16x32xf32> -> vector<16x32xf32>
    %cst_44 = arith.constant 0.000000e+00 : f32
    %91 = vector.broadcast %cst_44 : f32 to vector<16x32xf32>
    %92 = arith.cmpf ogt, %90, %91 : vector<16x32xf32>
    %93 = math.exp %90 : vector<16x32xf32>
    %cst_45 = arith.constant 1.000000e+00 : f32
    %94 = vector.broadcast %cst_45 : f32 to vector<16x32xf32>
    %95 = arith.subf %93, %94 : vector<16x32xf32>
    %96 = arith.select %92, %90, %95 : vector<16x32xi1>, vector<16x32xf32>
    %c0_46 = arith.constant 0 : index
    %c0_47 = arith.constant 0 : index
    %c0_48 = arith.constant 0 : index
    %97 = vector.load %arg6[%c0_46, %c0_47, %c0_48] : memref<1x1x16xf32, #tpu.memory_space<vmem>>, vector<1x1x16xf32>
    %98 = vector.shape_cast %97 : vector<1x1x16xf32> to vector<1x16xf32>
    %cst_49 = arith.constant dense<0.000000e+00> : vector<1x32xf32>
    %99 = tpu.matmul %98, %96, %cst_49 {dimension_numbers = #tpu.dot_dimension_numbers<[1], [0], [0], [1], [0, 0, 1, 1], [], []>} : vector<1x16xf32>, vector<16x32xf32>, vector<1x32xf32> -> vector<1x32xf32>
    %c0_50 = arith.constant 0 : index
    %c0_51 = arith.constant 0 : index
    %100 = vector.load %arg7[%c0_50, %c0_51] : memref<32x5xf32, #tpu.memory_space<vmem>>, vector<32x5xf32>
    %cst_52 = arith.constant dense<0.000000e+00> : vector<1x5xf32>
    %101 = tpu.matmul %99, %100, %cst_52 {dimension_numbers = #tpu.dot_dimension_numbers<[1], [0], [0], [1], [0, 0, 1, 1], [], []>} : vector<1x32xf32>, vector<32x5xf32>, vector<1x5xf32> -> vector<1x5xf32>
    %c0_53 = arith.constant 0 : index
    %c0_54 = arith.constant 0 : index
    %102 = vector.load %arg8[%c0_53, %c0_54] : memref<1x5xf32, #tpu.memory_space<vmem>>, vector<1x5xf32>
    %103 = arith.addf %101, %102 : vector<1x5xf32>
    %c0_55 = arith.constant 0 : index
    %c0_56 = arith.constant 0 : index
    %c0_57 = arith.constant 0 : index
    %104 = vector.load %arg9[%c0_55, %c0_56, %c0_57] : memref<1x1x5xf32, #tpu.memory_space<vmem>>, vector<1x1x5xf32>
    %105 = vector.shape_cast %104 : vector<1x1x5xf32> to vector<1x5xf32>
    %106 = vector.shape_cast %103 : vector<1x5xf32> to vector<1x1x5xf32>
    tpu.vector_store %arg9[%c0_55, %c0_56, %c0_57], %106 {strides = array<i32>} : memref<1x1x5xf32, #tpu.memory_space<vmem>>, vector<1x1x5xf32>,
    return
  }
  func.func @transform_0(%arg0: i32) -> (i32, i32, i32) {
    %c0_i32 = arith.constant 0 : i32
    %c0_i32_0 = arith.constant 0 : i32
    %c0_i32_1 = arith.constant 0 : i32
    return %arg0, %c0_i32, %c0_i32_0 : i32, i32, i32
  }
  func.func @transform_1(%arg0: i32) -> (i32, i32, i32) {
    %c0_i32 = arith.constant 0 : i32
    %c0_i32_0 = arith.constant 0 : i32
    %c0_i32_1 = arith.constant 0 : i32
    %c0_i32_2 = arith.constant 0 : i32
    return %c0_i32, %c0_i32_0, %c0_i32_1 : i32, i32, i32
  }
  func.func @transform_2(%arg0: i32) -> (i32, i32, i32) {
    %c0_i32 = arith.constant 0 : i32
    %c0_i32_0 = arith.constant 0 : i32
    %c0_i32_1 = arith.constant 0 : i32
    %c0_i32_2 = arith.constant 0 : i32
    return %c0_i32, %c0_i32_0, %c0_i32_1 : i32, i32, i32
  }
  func.func @transform_3(%arg0: i32) -> (i32, i32, i32) {
    %c0_i32 = arith.constant 0 : i32
    %c0_i32_0 = arith.constant 0 : i32
    %c0_i32_1 = arith.constant 0 : i32
    %c0_i32_2 = arith.constant 0 : i32
    return %c0_i32, %c0_i32_0, %c0_i32_1 : i32, i32, i32
  }
  func.func @transform_4(%arg0: i32) -> (i32, i32) {
    %c0_i32 = arith.constant 0 : i32
    %c0_i32_0 = arith.constant 0 : i32
    %c0_i32_1 = arith.constant 0 : i32
    return %c0_i32, %c0_i32_0 : i32, i32
  }
  func.func @transform_5(%arg0: i32) -> (i32, i32, i32) {
    %c0_i32 = arith.constant 0 : i32
    %c0_i32_0 = arith.constant 0 : i32
    %c0_i32_1 = arith.constant 0 : i32
    return %arg0, %c0_i32, %c0_i32_0 : i32, i32, i32
  }
  func.func @transform_6(%arg0: i32) -> (i32, i32) {
    %c0_i32 = arith.constant 0 : i32
    %c0_i32_0 = arith.constant 0 : i32
    %c0_i32_1 = arith.constant 0 : i32
    return %c0_i32, %c0_i32_0 : i32, i32
  }
  func.func @transform_7(%arg0: i32) -> (i32, i32) {
    %c0_i32 = arith.constant 0 : i32
    %c0_i32_0 = arith.constant 0 : i32
    %c0_i32_1 = arith.constant 0 : i32
    return %c0_i32, %c0_i32_0 : i32, i32
  }
  func.func @transform_8(%arg0: i32) -> (i32, i32, i32) {
    %c0_i32 = arith.constant 0 : i32
    %c0_i32_0 = arith.constant 0 : i32
    %c0_i32_1 = arith.constant 0 : i32
    return %arg0, %c0_i32, %c0_i32_0 : i32, i32, i32
  }
}

</mosaic_0001>

<llo_original>
// kernel: gat_forward.1
$region0: #{gat_forward.1}
  #allocation0 [shape = 'u32[]', space=smem, size = 0x4, offset = 0x4, fixed_abs, tag = 'smem constant byte address 0x4 - core index']
  #allocation1 [shape = 'u32[72,128]{1,0:T(1,128)}', space=vmem, size = 0x9000, scoped, tag = 'internal scratch']
  %s0 = inlined_call_operand.vmem [shape: f32[2,16,16], index: 0, kind: input, shape index: {}]
  %s1 = inlined_call_operand.vmem [shape: f32[2,16,16], index: 1, kind: input, shape index: {}]
  %s2 = inlined_call_operand.vmem [shape: bf16[2,16,16], index: 2, kind: input, shape index: {}]
  %s3 = inlined_call_operand.vmem [shape: bf16[2,16,32], index: 3, kind: input, shape index: {}]
  %s4 = inlined_call_operand.vmem [shape: bf16[32,2], index: 4, kind: input, shape index: {}]
  %s5 = inlined_call_operand.vmem [shape: f32[2,1,16], index: 5, kind: input, shape index: {}]
  %s6 = inlined_call_operand.vmem [shape: f32[32,5], index: 6, kind: input, shape index: {}]
  %s7 = inlined_call_operand.vmem [shape: f32[1,5], index: 7, kind: input, shape index: {}]
  %s8 = inlined_call_operand.vmem [shape: f32[2,1,5], index: 8, kind: output, shape index: {}]
  %s9 = sld [smem:[#allocation0]]
  $region65: #{gat_forward.1} parent=0
    _
  %s11 = ssub.s32 1, %s9
  %s12 = scalar_select 0, %s11, %s9
  loop: start=0, step=1, limit=4
  $region2: #{gat_forward.1} parent=0 // loop_pre_header
    _
  $region3: #{gat_forward.1} parent=0 // loop_header
    %s14 = sphi 0, %s18
    %p15 = scmp.ge.s32.totalorder %s14, 4
    %s24 = sphi 0, %s26
    %s27 = sphi 0, %s24
    %s28 = sphi 0, %s27
    %s44 = sphi 0, %s28
    %s48 = sphi 0, %s48
    %s50 = sphi 0, %s48
    %s51 = sphi 0, %s50
    %s65 = sphi 0, %s51
    %s69 = sphi 0, %s69
    %s71 = sphi 0, %s69
    %s72 = sphi 0, %s71
    %s86 = sphi 0, %s72
    %s90 = sphi 0, %s90
    %s92 = sphi 0, %s90
    %s93 = sphi 0, %s92
    %s107 = sphi 0, %s93
    %s111 = sphi 0, %s111
    %s113 = sphi 0, %s111
    %s114 = sphi 0, %s113
    %s128 = sphi 0, %s114
    %s134 = sphi 0, %s136
    %s137 = sphi 0, %s134
    %s138 = sphi 0, %s137
    %s154 = sphi 0, %s138
    %s158 = sphi 0, %s158
    %s160 = sphi 0, %s158
    %s161 = sphi 0, %s160
    %s175 = sphi 0, %s161
    %s179 = sphi 0, %s179
    %s181 = sphi 0, %s179
    %s182 = sphi 0, %s181
    %s196 = sphi 0, %s182
    %s202 = sphi 0, %s204
    %s205 = sphi 0, %s202
    %s206 = sphi 0, %s205
    %s222 = sphi 0, %s206
  $region4: #{gat_forward.1} parent=0 // loop_header_branch
    %17 = sbr.rel (%p15) target = $region8
  $region5: #{gat_forward.1} parent=0 // loop_body
    %s19 = ssub.s32 %s14, 1
    %s20 = ssub.s32 %s14, 2
    %s21 = sadd.s32 %s14, 1
    %s22 = ssub.s32 %s14, %s21
    %p23 = scmp.eq.s32.totalorder %s22, 0
    %s25 = sadd.s32 %s24, 1
    %s26 = scalar_select %p23, %s24, %s25
    %p29 = pneg %p23
    %p30 = scmp.eq.s32.totalorder %s14, 1
    %p31 = por %p29, %p30
    %p32 = scmp.ne.s32.totalorder %s24, %s27
    %p33 = scmp.eq.s32.totalorder %s14, 0
    %p34 = por %p32, %p33
    %p35 = scmp.ne.s32.totalorder %s24, %s27
    %p36 = scmp.eq.s32.totalorder %s19, 1
    %p37 = por %p35, %p36
    %p38 = scmp.ne.s32.totalorder %s27, %s28
    %p39 = scmp.eq.s32.totalorder %s19, 0
    %p40 = por %p38, %p39
    %p41 = scmp.ne.s32.totalorder %s27, %s28
    %p42 = scmp.eq.s32.totalorder %s20, 1
    %p43 = por %p41, %p42
    %p45 = scmp.ne.s32.totalorder %s28, %s44
    %p46 = scmp.eq.s32.totalorder %s20, 0
    %p47 = por %p45, %p46
    %s49 = sadd.s32 %s48, 1
    %p52 = scmp.eq.s32.totalorder %s14, 1
    %p53 = scmp.ne.s32.totalorder %s48, %s50
    %p54 = scmp.eq.s32.totalorder %s14, 0
    %p55 = por %p53, %p54
    %p56 = scmp.ne.s32.totalorder %s48, %s50
    %p57 = scmp.eq.s32.totalorder %s19, 1
    %p58 = por %p56, %p57
    %p59 = scmp.ne.s32.totalorder %s50, %s51
    %p60 = scmp.eq.s32.totalorder %s19, 0
    %p61 = por %p59, %p60
    %p62 = scmp.ne.s32.totalorder %s50, %s51
    %p63 = scmp.eq.s32.totalorder %s20, 1
    %p64 = por %p62, %p63
    %p66 = scmp.ne.s32.totalorder %s51, %s65
    %p67 = scmp.eq.s32.totalorder %s20, 0
    %p68 = por %p66, %p67
    %s70 = sadd.s32 %s69, 1
    %p73 = scmp.eq.s32.totalorder %s14, 1
    %p74 = scmp.ne.s32.totalorder %s69, %s71
    %p75 = scmp.eq.s32.totalorder %s14, 0
    %p76 = por %p74, %p75
    %p77 = scmp.ne.s32.totalorder %s69, %s71
    %p78 = scmp.eq.s32.totalorder %s19, 1
    %p79 = por %p77, %p78
    %p80 = scmp.ne.s32.totalorder %s71, %s72
    %p81 = scmp.eq.s32.totalorder %s19, 0
    %p82 = por %p80, %p81
    %p83 = scmp.ne.s32.totalorder %s71, %s72
    %p84 = scmp.eq.s32.totalorder %s20, 1
    %p85 = por %p83, %p84
    %p87 = scmp.ne.s32.totalorder %s72, %s86
    %p88 = scmp.eq.s32.totalorder %s20, 0
    %p89 = por %p87, %p88
    %s91 = sadd.s32 %s90, 1
    %p94 = scmp.eq.s32.totalorder %s14, 1
    %p95 = scmp.ne.s32.totalorder %s90, %s92
    %p96 = scmp.eq.s32.totalorder %s14, 0
    %p97 = por %p95, %p96
    %p98 = scmp.ne.s32.totalorder %s90, %s92
    %p99 = scmp.eq.s32.totalorder %s19, 1
    %p100 = por %p98, %p99
    %p101 = scmp.ne.s32.totalorder %s92, %s93
    %p102 = scmp.eq.s32.totalorder %s19, 0
    %p103 = por %p101, %p102
    %p104 = scmp.ne.s32.totalorder %s92, %s93
    %p105 = scmp.eq.s32.totalorder %s20, 1
    %p106 = por %p104, %p105
    %p108 = scmp.ne.s32.totalorder %s93, %s107
    %p109 = scmp.eq.s32.totalorder %s20, 0
    %p110 = por %p108, %p109
    %s112 = sadd.s32 %s111, 1
    %p115 = scmp.eq.s32.totalorder %s14, 1
    %p116 = scmp.ne.s32.totalorder %s111, %s113
    %p117 = scmp.eq.s32.totalorder %s14, 0
    %p118 = por %p116, %p117
    %p119 = scmp.ne.s32.totalorder %s111, %s113
    %p120 = scmp.eq.s32.totalorder %s19, 1
    %p121 = por %p119, %p120
    %p122 = scmp.ne.s32.totalorder %s113, %s114
    %p123 = scmp.eq.s32.totalorder %s19, 0
    %p124 = por %p122, %p123
    %p125 = scmp.ne.s32.totalorder %s113, %s114
    %p126 = scmp.eq.s32.totalorder %s20, 1
    %p127 = por %p125, %p126
    %p129 = scmp.ne.s32.totalorder %s114, %s128
    %p130 = scmp.eq.s32.totalorder %s20, 0
    %p131 = por %p129, %p130
    %s132 = ssub.s32 %s14, %s21
    %p133 = scmp.eq.s32.totalorder %s132, 0
    %s135 = sadd.s32 %s134, 1
    %s136 = scalar_select %p133, %s134, %s135
    %p139 = pneg %p133
    %p140 = scmp.eq.s32.totalorder %s14, 1
    %p141 = por %p139, %p140
    %p142 = scmp.ne.s32.totalorder %s134, %s137
    %p143 = scmp.eq.s32.totalorder %s14, 0
    %p144 = por %p142, %p143
    %p145 = scmp.ne.s32.totalorder %s134, %s137
    %p146 = scmp.eq.s32.totalorder %s19, 1
    %p147 = por %p145, %p146
    %p148 = scmp.ne.s32.totalorder %s137, %s138
    %p149 = scmp.eq.s32.totalorder %s19, 0
    %p150 = por %p148, %p149
    %p151 = scmp.ne.s32.totalorder %s137, %s138
    %p152 = scmp.eq.s32.totalorder %s20, 1
    %p153 = por %p151, %p152
    %p155 = scmp.ne.s32.totalorder %s138, %s154
    %p156 = scmp.eq.s32.totalorder %s20, 0
    %p157 = por %p155, %p156
    %s159 = sadd.s32 %s158, 1
    %p162 = scmp.eq.s32.totalorder %s14, 1
    %p163 = scmp.ne.s32.totalorder %s158, %s160
    %p164 = scmp.eq.s32.totalorder %s14, 0
    %p165 = por %p163, %p164
    %p166 = scmp.ne.s32.totalorder %s158, %s160
    %p167 = scmp.eq.s32.totalorder %s19, 1
    %p168 = por %p166, %p167
    %p169 = scmp.ne.s32.totalorder %s160, %s161
    %p170 = scmp.eq.s32.totalorder %s19, 0
    %p171 = por %p169, %p170
    %p172 = scmp.ne.s32.totalorder %s160, %s161
    %p173 = scmp.eq.s32.totalorder %s20, 1
    %p174 = por %p172, %p173
    %p176 = scmp.ne.s32.totalorder %s161, %s175
    %p177 = scmp.eq.s32.totalorder %s20, 0
    %p178 = por %p176, %p177
    %s180 = sadd.s32 %s179, 1
    %p183 = scmp.eq.s32.totalorder %s14, 1
    %p184 = scmp.ne.s32.totalorder %s179, %s181
    %p185 = scmp.eq.s32.totalorder %s14, 0
    %p186 = por %p184, %p185
    %p187 = scmp.ne.s32.totalorder %s179, %s181
    %p188 = scmp.eq.s32.totalorder %s19, 1
    %p189 = por %p187, %p188
    %p190 = scmp.ne.s32.totalorder %s181, %s182
    %p191 = scmp.eq.s32.totalorder %s19, 0
    %p192 = por %p190, %p191
    %p193 = scmp.ne.s32.totalorder %s181, %s182
    %p194 = scmp.eq.s32.totalorder %s20, 1
    %p195 = por %p193, %p194
    %p197 = scmp.ne.s32.totalorder %s182, %s196
    %p198 = scmp.eq.s32.totalorder %s20, 0
    %p199 = por %p197, %p198
    %s200 = ssub.s32 %s14, %s21
    %p201 = scmp.eq.s32.totalorder %s200, 0
    %s203 = sadd.s32 %s202, 1
    %s204 = scalar_select %p201, %s202, %s203
    %p207 = pneg %p201
    %p208 = scmp.eq.s32.totalorder %s14, 1
    %p209 = por %p207, %p208
    %p210 = scmp.ne.s32.totalorder %s202, %s205
    %p211 = scmp.eq.s32.totalorder %s14, 0
    %p212 = por %p210, %p211
    %p213 = scmp.ne.s32.totalorder %s202, %s205
    %p214 = scmp.eq.s32.totalorder %s19, 1
    %p215 = por %p213, %p214
    %p216 = scmp.ne.s32.totalorder %s205, %s206
    %p217 = scmp.eq.s32.totalorder %s19, 0
    %p218 = por %p216, %p217
    %p219 = scmp.ne.s32.totalorder %s205, %s206
    %p220 = scmp.eq.s32.totalorder %s20, 1
    %p221 = por %p219, %p220
    %p223 = scmp.ne.s32.totalorder %s206, %s222
    %p224 = scmp.eq.s32.totalorder %s20, 0
    %p225 = por %p223, %p224
    %p226 = scmp.le.s32.totalorder 1, %s14
    %p227 = scmp.lt.s32.totalorder %s14, 3
    %p228 = pnand %p226, %p227
    %p229 = pneg %p228
    // Predicated region
    $region9: #{gat_forward.1} parent=5 // pred_check
      _
    $region10: #{gat_forward.1} parent=5 // pred_check_branch
      %231 = sbr.rel (%p228) target = $region12
    $region11: #{gat_forward.1} parent=5 // pred_region
      %s232 = ssub.s32 %s14, 1
      // Predicated region
      $region13: #{gat_forward.1} parent=11 // pred_check
        %p233 = pneg %p61
      $region14: #{gat_forward.1} parent=11 // pred_check_branch
        %235 = sbr.rel (%p233) target = $region16
      $region15: #{gat_forward.1} parent=11 // pred_region
        _
      $region16: #{gat_forward.1} parent=11 // pred_fallthru
        _
      // Predicated region
      $region17: #{gat_forward.1} parent=11 // pred_check
        %p236 = pneg %p82
      $region18: #{gat_forward.1} parent=11 // pred_check_branch
        %238 = sbr.rel (%p236) target = $region20
      $region19: #{gat_forward.1} parent=11 // pred_region
        _
      $region20: #{gat_forward.1} parent=11 // pred_fallthru
        _
      // Predicated region
      $region21: #{gat_forward.1} parent=11 // pred_check
        %p239 = pneg %p103
      $region22: #{gat_forward.1} parent=11 // pred_check_branch
        %241 = sbr.rel (%p239) target = $region24
      $region23: #{gat_forward.1} parent=11 // pred_region
        _
      $region24: #{gat_forward.1} parent=11 // pred_fallthru
        _
      // Predicated region
      $region25: #{gat_forward.1} parent=11 // pred_check
        %p242 = pneg %p124
      $region26: #{gat_forward.1} parent=11 // pred_check_branch
        %244 = sbr.rel (%p242) target = $region28
      $region27: #{gat_forward.1} parent=11 // pred_region
        _
      $region28: #{gat_forward.1} parent=11 // pred_fallthru
        _
      // Predicated region
      $region29: #{gat_forward.1} parent=11 // pred_check
        %p245 = pneg %p171
      $region30: #{gat_forward.1} parent=11 // pred_check_branch
        %247 = sbr.rel (%p245) target = $region32
      $region31: #{gat_forward.1} parent=11 // pred_region
        _
      $region32: #{gat_forward.1} parent=11 // pred_fallthru
        _
      // Predicated region
      $region33: #{gat_forward.1} parent=11 // pred_check
        %p248 = pneg %p192
      $region34: #{gat_forward.1} parent=11 // pred_check_branch
        %250 = sbr.rel (%p248) target = $region36
      $region35: #{gat_forward.1} parent=11 // pred_region
        _
      $region36: #{gat_forward.1} parent=11 // pred_fallthru
        _
    $region12: #{gat_forward.1} parent=5 // pred_fallthru
      _
    %p251 = scmp.lt.s32.totalorder %s14, 2
    // Predicated region
    $region37: #{gat_forward.1} parent=5 // pred_check
      %p252 = pneg %p251
    $region38: #{gat_forward.1} parent=5 // pred_check_branch
      %254 = sbr.rel (%p252) target = $region40
    $region39: #{gat_forward.1} parent=5 // pred_region
      // Predicated region
      $region41: #{gat_forward.1} parent=39 // pred_check
        %p255 = pneg %p34
      $region42: #{gat_forward.1} parent=39 // pred_check_branch
        %257 = sbr.rel (%p255) target = $region44
      $region43: #{gat_forward.1} parent=39 // pred_region
        %p258 = scmp.lt.s32.totalorder %s14, 1
        %s259 = scalar_select %p258, %s14, 1
        %s260 = smul.addr %s259, 2
        %s261 = smul.addr %s260, 8
        %s262 = scalar_lea.vmem %s0, %s261
      $region44: #{gat_forward.1} parent=39 // pred_fallthru
        _
      // Predicated region
      $region45: #{gat_forward.1} parent=39 // pred_check
        %p263 = pneg %p144
      $region46: #{gat_forward.1} parent=39 // pred_check_branch
        %265 = sbr.rel (%p263) target = $region48
      $region47: #{gat_forward.1} parent=39 // pred_region
        %p266 = scmp.lt.s32.totalorder %s14, 1
        %s267 = scalar_select %p266, %s14, 1
        %s268 = scalar_lea.vmem %s5, %s267
      $region48: #{gat_forward.1} parent=39 // pred_fallthru
        _
    $region40: #{gat_forward.1} parent=5 // pred_fallthru
      _
    %p269 = scmp.le.s32.totalorder 1, %s14
    %p270 = scmp.lt.s32.totalorder %s14, 3
    %p271 = pnand %p269, %p270
    %p272 = pneg %p271
    // Predicated region
    $region49: #{gat_forward.1} parent=5 // pred_check
      _
    $region50: #{gat_forward.1} parent=5 // pred_check_branch
      %274 = sbr.rel (%p271) target = $region52
    $region51: #{gat_forward.1} parent=5 // pred_region
      %s275 = ssub.s32 %s14, 1
      %p276 = scmp.lt.s32.totalorder %s19, 1
      %s277 = scalar_select %p276, %s19, 1
      %s278 = smul.addr %s277, 2
      %s279 = smul.addr %s278, 8
      %s280 = scalar_lea.vmem %s0, %s279
      %p281 = pneg %p40
      %p282 = pneg %p37
      %p283 = pneg %p61
      %p284 = pneg %p58
      %p285 = pneg %p82
      %p286 = pneg %p79
      %p287 = pneg %p103
      %p288 = pneg %p100
      %p289 = pneg %p124
      %p290 = pneg %p121
      %p291 = scmp.lt.s32.totalorder %s19, 1
      %s292 = scalar_select %p291, %s19, 1
      %s293 = scalar_lea.vmem %s5, %s292
      %p294 = pneg %p150
      %p295 = pneg %p147
      %p296 = pneg %p171
      %p297 = pneg %p168
      %p298 = pneg %p192
      %p299 = pneg %p189
      %p300 = pneg %p218
      %p301 = pneg %p215
      %p302 = scmp.lt.s32.totalorder %s19, 1
      %s303 = scalar_select %p302, %s19, 1
      %s304 = scalar_lea.vmem %s8, %s303
      %p305 = scmp.lt.s32.totalorder %s19, 1
      %s306 = scalar_select %p305, %s19, 1
      %s307 = smul.addr %s306, 2
      %s308 = smul.addr %s307, 8
      %s309 = scalar_lea.vmem %s0, %s308
      %p310 = scmp.lt.s32.totalorder %s19, 1
      %s311 = scalar_select %p310, %s19, 1
      %s312 = scalar_lea.vmem %s5, %s311
      %p313 = scmp.lt.s32.totalorder %s19, 1
      %s314 = scalar_select %p313, %s19, 1
      %s315 = scalar_lea.vmem %s8, %s314
      %v317 = vld [vmem:[%s309] sm:$0xff]
      %v318 = vld [vmem:[%s309 + $0x8] sm:$0xff]
      %vm319 = vcmp.gt.f32.partialorder %v317, 0.0
      %vm320 = vcmp.gt.f32.partialorder %v318, 0.0
      %v321 = vld [vmem:[%s1] sm:$0xff]
      %v322 = vld [vmem:[%s1 + $0x8] sm:$0xff]
      %v323 = vsel %vm319, %v321, -9e+15
      %v324 = vsel %vm320, %v322, -9e+15
      %vm325 = vcmask 130048
      %v326 = vsel %vm325, %v323, -inf
      %v327 = vsel %vm325, %v324, -inf
      %v328 = vmax.f32 %v326, %v327
      %v329 = vrot.slane %v328, 4
      %v330 = vmax.f32 %v328, %v329
      %v331 = vrot.slane %v330, 2
      %v332 = vmax.f32 %v330, %v331
      %v333 = vrot.slane %v332, 1
      %v334 = vmax.f32 %v332, %v333
      %v335 = vsub.f32 %v323, %v334
      %v336 = vsub.f32 %v324, %v334
      %v337 = vmul.f32 %v335, 1.442695
      %v338 = vpow.pop %v337
      %v339 = vmul.f32 %v336, 1.442695
      %v340 = vpow.pop %v339
      %v341 = vsel %vm325, %v338, 0.0
      %v342 = vsel %vm325, %v340, 0.0
      %v343 = vadd.f32 %v341, %v342
      %v344 = vrot.slane %v343, 4
      %v345 = vadd.f32 %v343, %v344
      %v346 = vrot.slane %v345, 2
      %v347 = vadd.f32 %v345, %v346
      %v348 = vrot.slane %v347, 1
      %v349 = vadd.f32 %v347, %v348
      %v350 = vrcp.pop %v349
      %v351 = vmul.f32 %v349, %v350
      %v352 = vsub.f32 1.0, %v351
      %v353 = vmul.f32 %v350, %v352
      %v354 = vadd.f32 %v350, %v353
      %vm355 = vweird.f32 %v349
      %vm356 = vweird.f32 %v350
      %vm357 = vmor %vm355, %vm356
      %v358 = vsel %vm357, %v350, %v354
      %v359 = vand.u32 2147483647, %v349
      %vm360 = vcmp.eq.f32.partialorder %v359, 8.507059e+37
      %v361 = vand.u32 %v349, 2147483648
      %v362 = vor.u32 1.1754944e-38, %v361
      %v363 = vsel %vm360, %v362, %v358
      %v364 = vmul.f32 %v338, %v363
      %v365 = vmul.f32 %v340, %v363
      %v366 = vpack.c.bf16 %v365, %v364
      %v367 = vld [vmem:[%s2] sm:$0xf]
      %v368 = vld [vmem:[%s2 + $0x4] sm:$0xf]
      %v371 = vunpack.c.l.b16 %v367
      %v372 = vunpack.c.l.b16 %v368
      %v373 = vpack.c.b16 %v372, %v371
      %v376 = vsel %vm325, %v366, 0
      %378 = vmatpush.bf16.msra.mxu0 0
      %379 = vmatpush.bf16.msra.mxu0 0
      %380 = vmatpush.bf16.msra.mxu0 0
      %381 = vmatpush.bf16.msra.mxu0 0
      %382 = vmatpush.bf16.msra.mxu0 0
      %383 = vmatpush.bf16.msra.mxu0 0
      %384 = vmatpush.bf16.msra.mxu0 0
      %385 = vmatpush.bf16.msra.mxu0 %v373
      %386 = vmatmul.bf16.gmra.mxu0 %v376
      %v387 = vpop.f32.mrf.mxu0
      %v388 = vadd.f32 0.0, %v387
      %v389 = vpop.f32.mrf.mxu0
      %v390 = vadd.f32 0.0, %v389
      %391 = vdwg.mxu0
      %vm392 = vcmp.gt.f32.partialorder %v388, 0.0
      %vm393 = vcmp.gt.f32.partialorder %v390, 0.0
      %v394 = vmul.f32 %v388, 1.442695
      %v395 = vpow.pop %v394
      %v396 = vmul.f32 %v390, 1.442695
      %v397 = vpow.pop %v396
      %v398 = vsub.f32 %v395, 1.0
      %v399 = vsub.f32 %v397, 1.0
      %v400 = vsel %vm392, %v388, %v398
      %v401 = vsel %vm393, %v390, %v399
      %v402 = vpack.c.bf16 %v401, %v400
      %v403 = vld [vmem:[%s3] sm:$0xf]
      %v404 = vld [vmem:[%s3 + $0x4] sm:$0xf]
      %s405 = scalar_lea.vmem %s1, 16
      %v406 = vld [vmem:[%s405] sm:$0xff]
      %v407 = vld [vmem:[%s405 + $0x8] sm:$0xff]
      %v408 = vsel %vm319, %v406, -9e+15
      %v409 = vsel %vm320, %v407, -9e+15
      %v410 = vsel %vm325, %v408, -inf
      %v411 = vsel %vm325, %v409, -inf
      %v412 = vmax.f32 %v410, %v411
      %v413 = vrot.slane %v412, 4
      %v414 = vmax.f32 %v412, %v413
      %v415 = vrot.slane %v414, 2
      %v416 = vmax.f32 %v414, %v415
      %v417 = vrot.slane %v416, 1
      %v418 = vmax.f32 %v416, %v417
      %v419 = vsub.f32 %v408, %v418
      %v420 = vsub.f32 %v409, %v418
      %v421 = vmul.f32 %v419, 1.442695
      %v422 = vpow.pop %v421
      %v423 = vmul.f32 %v420, 1.442695
      %v424 = vpow.pop %v423
      %v425 = vsel %vm325, %v422, 0.0
      %v426 = vsel %vm325, %v424, 0.0
      %v427 = vadd.f32 %v425, %v426
      %v428 = vrot.slane %v427, 4
      %v429 = vadd.f32 %v427, %v428
      %v430 = vrot.slane %v429, 2
      %v431 = vadd.f32 %v429, %v430
      %v432 = vrot.slane %v431, 1
      %v433 = vadd.f32 %v431, %v432
      %v434 = vrcp.pop %v433
      %v435 = vmul.f32 %v433, %v434
      %v436 = vsub.f32 1.0, %v435
      %v437 = vmul.f32 %v434, %v436
      %v438 = vadd.f32 %v434, %v437
      %vm439 = vweird.f32 %v433
      %vm440 = vweird.f32 %v434
      %vm441 = vmor %vm439, %vm440
      %v442 = vsel %vm441, %v434, %v438
      %v443 = vand.u32 2147483647, %v433
      %vm444 = vcmp.eq.f32.partialorder %v443, 8.507059e+37
      %v445 = vand.u32 %v433, 2147483648
      %v446 = vor.u32 1.1754944e-38, %v445
      %v447 = vsel %vm444, %v446, %v442
      %v448 = vmul.f32 %v422, %v447
      %v449 = vmul.f32 %v424, %v447
      %v450 = vpack.c.bf16 %v449, %v448
      %s451 = scalar_lea.vmem %s2, 8
      %v452 = vld [vmem:[%s451] sm:$0xf]
      %v453 = vld [vmem:[%s451 + $0x4] sm:$0xf]
      %v456 = vunpack.c.l.b16 %v452
      %v457 = vunpack.c.l.b16 %v453
      %v458 = vpack.c.b16 %v457, %v456
      %v461 = vsel %vm325, %v450, 0
      %463 = vmatpush.bf16.msra.mxu0 0
      %464 = vmatpush.bf16.msra.mxu0 0
      %465 = vmatpush.bf16.msra.mxu0 0
      %466 = vmatpush.bf16.msra.mxu0 0
      %467 = vmatpush.bf16.msra.mxu0 0
      %468 = vmatpush.bf16.msra.mxu0 0
      %469 = vmatpush.bf16.msra.mxu0 0
      %470 = vmatpush.bf16.msra.mxu0 %v458
      %471 = vmatmul.bf16.gmra.mxu0 %v461
      %v472 = vpop.f32.mrf.mxu0
      %v473 = vadd.f32 0.0, %v472
      %v474 = vpop.f32.mrf.mxu0
      %v475 = vadd.f32 0.0, %v474
      %476 = vdwg.mxu0
      %vm477 = vcmp.gt.f32.partialorder %v473, 0.0
      %vm478 = vcmp.gt.f32.partialorder %v475, 0.0
      %v479 = vmul.f32 %v473, 1.442695
      %v480 = vpow.pop %v479
      %v481 = vmul.f32 %v475, 1.442695
      %v482 = vpow.pop %v481
      %v483 = vsub.f32 %v480, 1.0
      %v484 = vsub.f32 %v482, 1.0
      %v485 = vsel %vm477, %v473, %v483
      %v486 = vsel %vm478, %v475, %v484
      %v487 = vpack.c.bf16 %v486, %v485
      %s488 = scalar_lea.vmem %s3, 8
      %v489 = vld [vmem:[%s488] sm:$0xf]
      %v490 = vld [vmem:[%s488 + $0x4] sm:$0xf]
      %v493 = vunpack.c.l.b16 %v489
      %v494 = vunpack.c.l.b16 %v490
      %v495 = vpack.c.b16 %v494, %v493
      %v498 = vsel %vm325, %v487, 0
      %500 = vmatpush.bf16.msra.mxu0 0
      %501 = vmatpush.bf16.msra.mxu0 0
      %502 = vmatpush.bf16.msra.mxu0 0
      %503 = vmatpush.bf16.msra.mxu0 0
      %504 = vmatpush.bf16.msra.mxu0 0
      %505 = vmatpush.bf16.msra.mxu0 0
      %506 = vmatpush.bf16.msra.mxu0 0
      %507 = vmatpush.bf16.msra.mxu0 %v495
      %508 = vmatmul.bf16.gmra.mxu0 %v498
      %v509 = vpop.f32.mrf.mxu0
      %v510 = vadd.f32 0.0, %v509
      %v511 = vpop.f32.mrf.mxu0
      %v512 = vadd.f32 0.0, %v511
      %513 = vdwg.mxu0
      %v516 = vunpack.c.l.b16 %v403
      %v517 = vunpack.c.l.b16 %v404
      %v518 = vpack.c.b16 %v517, %v516
      %v521 = vsel %vm325, %v402, 0
      %523 = vmatpush.bf16.msra.mxu0 0
      %524 = vmatpush.bf16.msra.mxu0 0
      %525 = vmatpush.bf16.msra.mxu0 0
      %526 = vmatpush.bf16.msra.mxu0 0
      %527 = vmatpush.bf16.msra.mxu0 0
      %528 = vmatpush.bf16.msra.mxu0 0
      %529 = vmatpush.bf16.msra.mxu0 0
      %530 = vmatpush.bf16.msra.mxu0 %v518
      %531 = vmatmul.bf16.gmra.mxu0 %v521
      %v532 = vpop.f32.mrf.mxu0
      %v533 = vadd.f32 %v510, %v532
      %v534 = vpop.f32.mrf.mxu0
      %v535 = vadd.f32 %v512, %v534
      %536 = vdwg.mxu0
      %v537 = vpack.c.bf16 %v535, %v533
      %v538 = vld [vmem:[%s4] sm:$0xf]
      %v539 = vld [vmem:[%s4 + $0x4] sm:$0xf]
      %v540 = vld [vmem:[%s4 + $0x8] sm:$0xf]
      %v541 = vld [vmem:[%s4 + $0xc] sm:$0xf]
      %v546 = vunpack.c.l.b16 %v538
      %v547 = vunpack.c.l.b16 %v539
      %v548 = vunpack.c.l.b16 %v540
      %v549 = vunpack.c.l.b16 %v541
      %v550 = vpack.c.b16 %v547, %v546
      %v551 = vpack.c.b16 %v549, %v548
      %vm554 = vcmask 261120
      %v556 = vsel %vm554, %v537, 0
      %558 = vmatpush.bf16.msra.mxu0 0
      %559 = vmatpush.bf16.msra.mxu0 0
      %560 = vmatpush.bf16.msra.mxu0 0
      %561 = vmatpush.bf16.msra.mxu0 0
      %562 = vmatpush.bf16.msra.mxu0 0
      %563 = vmatpush.bf16.msra.mxu0 0
      %564 = vmatpush.bf16.msra.mxu0 %v551
      %565 = vmatpush.bf16.msra.mxu0 %v550
      %566 = vmatmul.bf16.gmra.mxu0 %v556
      %v567 = vpop.f32.mrf.mxu0
      %v568 = vadd.f32 0.0, %v567
      %v569 = vpop.f32.mrf.mxu0
      %v570 = vadd.f32 0.0, %v569
      %571 = vdwg.mxu0
      %574 = vrot.lane.b32.xlu0 %v568, 127
      %v575 = vpop.permute.xlu0 %574
      %576 = vrot.lane.b32.xlu0 %v570, 127
      %v577 = vpop.permute.xlu0 %576
      %580 = vxpose.xlu0.b32.start [1/16] %v575, 128
      %581 = vxpose.xlu0.b32.cont [2/16] %v577, 128
      %582 = vxpose.xlu0.b32.cont [3/16] 0.0, 128
      %583 = vxpose.xlu0.b32.cont [4/16] 0.0, 128
      %584 = vxpose.xlu0.b32.cont [5/16] 0.0, 128
      %585 = vxpose.xlu0.b32.cont [6/16] 0.0, 128
      %586 = vxpose.xlu0.b32.cont [7/16] 0.0, 128
      %587 = vxpose.xlu0.b32.cont [8/16] 0.0, 128
      %588 = vxpose.xlu0.b32.cont [9/16] 0.0, 128
      %589 = vxpose.xlu0.b32.cont [10/16] 0.0, 128
      %590 = vxpose.xlu0.b32.cont [11/16] 0.0, 128
      %591 = vxpose.xlu0.b32.cont [12/16] 0.0, 128
      %592 = vxpose.xlu0.b32.cont [13/16] 0.0, 128
      %593 = vxpose.xlu0.b32.cont [14/16] 0.0, 128
      %594 = vxpose.xlu0.b32.cont [15/16] 0.0, 128
      %595 = vxpose.xlu0.b32.end [16/16] 0.0, 128
      %v596 = vpop.trf.xlu0
      %v597 = vpop.trf.xlu0
      %v598 = vpop.trf.xlu0
      %v599 = vpop.trf.xlu0
      %v600 = vpop.trf.xlu0
      %v601 = vpop.trf.xlu0
      %v602 = vpop.trf.xlu0
      %v603 = vpop.trf.xlu0
      %v604 = vpop.trf.xlu0
      %v605 = vpop.trf.xlu0
      %v606 = vpop.trf.xlu0
      %v607 = vpop.trf.xlu0
      %v608 = vpop.trf.xlu0
      %v609 = vpop.trf.xlu0
      %v610 = vpop.trf.xlu0
      %v611 = vpop.trf.xlu0
      %612 = vset.pattern.permute.xlu0 0
      %613 = vperm.xlu0 %612, %v568
      %v614 = vpop.permute.xlu0 %613
      %616 = vset.pattern.permute.xlu0 0
      %617 = vperm.xlu0 %616, %v570
      %v618 = vpop.permute.xlu0 %617
      %v620 = vperm.slane %v596, 0
      %v621 = vadd.f32 %v614, %v620
      %v622 = vadd.f32 %v618, %v620
      %vm623 = vcmp.gt.f32.partialorder %v621, 0.0
      %vm624 = vcmp.gt.f32.partialorder %v622, 0.0
      %v625 = vmul.f32 %v621, 0.2
      %v626 = vmul.f32 %v622, 0.2
      %v627 = vsel %vm623, %v621, %v625
      %v628 = vsel %vm624, %v622, %v626
      %v629 = vsel %vm319, %v627, -9e+15
      %v630 = vsel %vm320, %v628, -9e+15
      %v631 = vsel %vm325, %v629, -inf
      %v632 = vsel %vm325, %v630, -inf
      %v633 = vmax.f32 %v631, %v632
      %v634 = vrot.slane %v633, 4
      %v635 = vmax.f32 %v633, %v634
      %v636 = vrot.slane %v635, 2
      %v637 = vmax.f32 %v635, %v636
      %v638 = vrot.slane %v637, 1
      %v639 = vmax.f32 %v637, %v638
      %v640 = vsub.f32 %v629, %v639
      %v641 = vsub.f32 %v630, %v639
      %v642 = vmul.f32 %v640, 1.442695
      %v643 = vpow.pop %v642
      %v644 = vmul.f32 %v641, 1.442695
      %v645 = vpow.pop %v644
      %v646 = vsel %vm325, %v643, 0.0
      %v647 = vsel %vm325, %v645, 0.0
      %v648 = vadd.f32 %v646, %v647
      %v649 = vrot.slane %v648, 4
      %v650 = vadd.f32 %v648, %v649
      %v651 = vrot.slane %v650, 2
      %v652 = vadd.f32 %v650, %v651
      %v653 = vrot.slane %v652, 1
      %v654 = vadd.f32 %v652, %v653
      %v655 = vrcp.pop %v654
      %v656 = vmul.f32 %v654, %v655
      %v657 = vsub.f32 1.0, %v656
      %v658 = vmul.f32 %v655, %v657
      %v659 = vadd.f32 %v655, %v658
      %vm660 = vweird.f32 %v654
      %vm661 = vweird.f32 %v655
      %vm662 = vmor %vm660, %vm661
      %v663 = vsel %vm662, %v655, %v659
      %v664 = vand.u32 2147483647, %v654
      %vm665 = vcmp.eq.f32.partialorder %v664, 8.507059e+37
      %v666 = vand.u32 %v654, 2147483648
      %v667 = vor.u32 1.1754944e-38, %v666
      %v668 = vsel %vm665, %v667, %v663
      %v669 = vmul.f32 %v643, %v668
      %v670 = vmul.f32 %v645, %v668
      %v671 = vpack.c.bf16 %v670, %v669
      %v673 = vsel %vm325, %v671, 0
      %675 = vmatpush.bf16.msra.mxu0 0
      %676 = vmatpush.bf16.msra.mxu0 0
      %677 = vmatpush.bf16.msra.mxu0 0
      %678 = vmatpush.bf16.msra.mxu0 0
      %679 = vmatpush.bf16.msra.mxu0 0
      %680 = vmatpush.bf16.msra.mxu0 0
      %681 = vmatpush.bf16.msra.mxu0 0
      %682 = vmatpush.bf16.msra.mxu0 %v537
      %683 = vmatmul.bf16.gmra.mxu0 %v673
      %v684 = vpop.f32.mrf.mxu0
      %v685 = vadd.f32 0.0, %v684
      %v686 = vpop.f32.mrf.mxu0
      %v687 = vadd.f32 0.0, %v686
      %688 = vdwg.mxu0
      %vm689 = vcmp.gt.f32.partialorder %v685, 0.0
      %vm690 = vcmp.gt.f32.partialorder %v687, 0.0
      %v691 = vmul.f32 %v685, 1.442695
      %v692 = vpow.pop %v691
      %v693 = vmul.f32 %v687, 1.442695
      %v694 = vpow.pop %v693
      %v695 = vsub.f32 %v692, 1.0
      %v696 = vsub.f32 %v694, 1.0
      %v697 = vsel %vm689, %v685, %v695
      %v698 = vsel %vm690, %v687, %v696
      %v699 = vld [vmem:[%s312] sm:$0x1]
      %v701 = vsel %vm325, %v699, 0
      %703 = vmatpush.msra.mxu0 0.0
      %704 = vmatpush.msra.mxu0 0.0
      %705 = vmatpush.msra.mxu0 0.0
      %706 = vmatpush.msra.mxu0 0.0
      %707 = vmatpush.msra.mxu0 0.0
      %708 = vmatpush.msra.mxu0 0.0
      %709 = vmatpush.msra.mxu0 0.0
      %710 = vmatpush.msra.mxu0 0.0
      %711 = vmatpush.msra.mxu0 0.0
      %712 = vmatpush.msra.mxu0 0.0
      %713 = vmatpush.msra.mxu0 0.0
      %714 = vmatpush.msra.mxu0 0.0
      %715 = vmatpush.msra.mxu0 0.0
      %716 = vmatpush.msra.mxu0 0.0
      %717 = vmatpush.msra.mxu0 %v698
      %718 = vmatpush.msra.mxu0 %v697
      %719 = vmatmul.f32.gmra.mxu0 %v701
      %v720 = vpop.f32.mrf.mxu0
      %v721 = vadd.f32 0.0, %v720
      %722 = vdwg.mxu0
      %v723 = vld [vmem:[%s6] sm:$0xff]
      %v724 = vld [vmem:[%s6 + $0x8] sm:$0xff]
      %v725 = vld [vmem:[%s6 + $0x10] sm:$0xff]
      %v726 = vld [vmem:[%s6 + $0x18] sm:$0xff]
      %v727 = vld [vmem:[%s7] sm:$0x1]
      %v729 = vsel %vm554, %v721, 0
      %731 = vmatpush.msra.mxu0 0.0
      %732 = vmatpush.msra.mxu0 0.0
      %733 = vmatpush.msra.mxu0 0.0
      %734 = vmatpush.msra.mxu0 0.0
      %735 = vmatpush.msra.mxu0 0.0
      %736 = vmatpush.msra.mxu0 0.0
      %737 = vmatpush.msra.mxu0 0.0
      %738 = vmatpush.msra.mxu0 0.0
      %739 = vmatpush.msra.mxu0 0.0
      %740 = vmatpush.msra.mxu0 0.0
      %741 = vmatpush.msra.mxu0 0.0
      %742 = vmatpush.msra.mxu0 0.0
      %743 = vmatpush.msra.mxu0 %v726
      %744 = vmatpush.msra.mxu0 %v725
      %745 = vmatpush.msra.mxu0 %v724
      %746 = vmatpush.msra.mxu0 %v723
      %747 = vmatmul.f32.gmra.mxu0 %v729
      %v748 = vpop.f32.mrf.mxu0
      %v749 = vadd.f32 %v727, %v748
      %750 = vdwg.mxu0
      %vm751 = vcmask 32768
      %752 = vst.msk [vmem:[%s315] sm:$0x1] %vm751, %v749
      %p753 = scmp.lt.s32.totalorder %s19, 1
      %s754 = scalar_select %p753, %s19, 1
      %s755 = scalar_lea.vmem %s8, %s754
      // Predicated region
      $region53: #{gat_forward.1} parent=51 // pred_check
        %p756 = pneg %p215
      $region54: #{gat_forward.1} parent=51 // pred_check_branch
        %758 = sbr.rel (%p756) target = $region56
      $region55: #{gat_forward.1} parent=51 // pred_region
        _
      $region56: #{gat_forward.1} parent=51 // pred_fallthru
        _
    $region52: #{gat_forward.1} parent=5 // pred_fallthru
      _
    %p759 = scmp.le.s32.totalorder 2, %s14
    // Predicated region
    $region57: #{gat_forward.1} parent=5 // pred_check
      %p760 = pneg %p759
    $region58: #{gat_forward.1} parent=5 // pred_check_branch
      %762 = sbr.rel (%p760) target = $region60
    $region59: #{gat_forward.1} parent=5 // pred_region
      %s763 = ssub.s32 %s14, 2
      // Predicated region
      $region61: #{gat_forward.1} parent=59 // pred_check
        %p764 = pneg %p221
      $region62: #{gat_forward.1} parent=59 // pred_check_branch
        %766 = sbr.rel (%p764) target = $region64
      $region63: #{gat_forward.1} parent=59 // pred_region
        %p767 = scmp.lt.s32.totalorder %s20, 1
        %s768 = scalar_select %p767, %s20, 1
        %s769 = scalar_lea.vmem %s8, %s768
      $region64: #{gat_forward.1} parent=59 // pred_fallthru
        _
    $region60: #{gat_forward.1} parent=5 // pred_fallthru
      _
  $region6: #{gat_forward.1} parent=0 // loop_footer
    %s18 = sadd.s32 1, %s14
  $region7: #{gat_forward.1} parent=0 // loop_footer_branch
    %13 = sbr.rel target = $region3
  $region8: #{gat_forward.1} parent=0 // loop_exit
    _

</llo_original>
